<compile_context>
chip_gen: v7x
topology: tpu7x:2x2x1
jax: 0.10.0
libtpu: 0.0.40
codegen_flags: <defaults>
</compile_context>

<pallas_src>
import jax
import jax.numpy as jnp
from jax.experimental import pallas as pl
from jax.experimental.pallas import tpu as pltpu


def _round_up(x: int, m: int) -> int:
    return (x + m - 1) // m * m


def _linear_head_kernel(x_ref, w_ref, b_ref, o_ref):
    # x_ref: (TM, D) f32   w_ref: (D, C) bf16   b_ref: (1, C) f32
    # o_ref: (TM, C) f32
    # Cast activations to bf16 in-register (no extra HBM copy), accumulate
    # in f32 on the MXU, add bias in f32.
    x_bf = x_ref[...].astype(jnp.bfloat16)
    acc = jnp.dot(x_bf, w_ref[...], preferred_element_type=jnp.float32)
    o_ref[...] = acc + b_ref[...]


def linear_head(x_flat: jax.Array, w_bf16: jax.Array, b_f32: jax.Array,
                *, tm: int = 512) -> jax.Array:
    """x_flat: (R, D) f32, w_bf16: (D, C) bf16, b_f32: (1, C) f32
    -> logits (R, C) float32.

    Row-tiled Pallas matmul + bias.  No padding of rows or classes: the
    class dim is emitted at its true width (full-array last dim is a legal
    block), and a cdiv grid with a masked partial final block handles any R.
    """
    R, D = x_flat.shape
    C = w_bf16.shape[1]

    # Row tile: exact single tile for small R; otherwise a multiple of 8
    # chosen so there are at least 2 tiles (v7x megacore) and capped at tm.
    if R <= 256:
        TM = R
    else:
        TM = min(tm, _round_up(pl.cdiv(R, 2), 8))
    grid = (pl.cdiv(R, TM),)

    cost = pl.CostEstimate(
        flops=2 * R * D * C,
        transcendentals=0,
        bytes_accessed=R * D * 4 + D * C * 2 + C * 4 + R * C * 4,
    )

    out = pl.pallas_call(
        _linear_head_kernel,
        out_shape=jax.ShapeDtypeStruct((R, C), jnp.float32),
        grid=grid,
        in_specs=[
            pl.BlockSpec((TM, D), lambda i: (i, 0)),   # row tile, pipelined
            pl.BlockSpec((D, C), lambda i: (0, 0)),    # weights resident in VMEM
            pl.BlockSpec((1, C), lambda i: (0, 0)),    # bias resident in VMEM
        ],
        out_specs=pl.BlockSpec((TM, C), lambda i: (i, 0)),
        compiler_params=pltpu.CompilerParams(
            dimension_semantics=("parallel",),          # shard row tiles (v7x 2 TCs)
            vmem_limit_bytes=32 * 1024 * 1024,          # above v5e's 16 MiB default
        ),
        cost_estimate=cost,
    )(x_flat, w_bf16, b_f32)

    return out


class PallasTask:
    """Concrete realization of the abstract `Task` with a Pallas linear head."""

    def __init__(self, hidden: int, num_classes: int, key: jax.Array):
        kw, kb = jax.random.split(key)
        # deterministic synthetic init (matches nn.Linear(hidden, num_classes) shapes)
        w = jax.random.normal(kw, (hidden, num_classes), jnp.float32) * 0.02
        b = jax.random.normal(kb, (1, num_classes), jnp.float32) * 0.02
        # Pre-cast ONCE: bf16 weights (full-rate bf16 MXU, half the HBM bytes),
        # f32 bias.  Avoids per-call cast ops in the forward path.
        self.w = w                                   # f32 reference copy
        self.b = b
        self.w_bf16 = w.astype(jnp.bfloat16)
        self.b_f32 = b.astype(jnp.float32)

    # --- forward (hot path in Pallas) ---------------------------------------
    def forward(self, x: dict) -> dict:
        embed = x["embed"]                                 # (B, N, D)
        B, N, D = embed.shape
        flat = embed.reshape(B * N, D)
        logits = linear_head(flat, self.w_bf16, self.b_f32)  # Pallas matmul + bias
        return {"task_logits": logits.reshape(B, N, -1)}

    def predict(self, outputs: dict, **kwargs) -> dict:
        return {"task_pred": jnp.argmax(outputs["task_logits"], axis=-1)}

    def loss(self, outputs: dict, targets: dict) -> dict:
        logits = outputs["task_logits"]
        labels = targets["task_labels"]
        logp = jax.nn.log_softmax(logits, axis=-1)
        nll = -jnp.take_along_axis(logp, labels[..., None], axis=-1)[..., 0]
        return {"task_loss": jnp.mean(nll)}

    # --- concrete base-class methods (reproduced exactly) -------------------
    def cost(self, outputs: dict, targets: dict, **kwargs) -> dict:
        return {}

    def attn_mask(self, outputs, **kwargs):
        return {}

    def key_mask(self, outputs, **kwargs):
        return {}

    def query_mask(self, outputs, **kwargs):
        return None


if __name__ == "__main__":
    key = jax.random.PRNGKey(0)
    k_param, k_embed, k_lbl = jax.random.split(key, 3)

    batch, seq, hidden, num_classes = 2, 8, 32, 8
    task = PallasTask(hidden, num_classes, k_param)

    embed = jax.random.normal(k_embed, (batch, seq, hidden), jnp.float32)
    labels = jax.random.randint(k_lbl, (batch, seq), 0, num_classes)

    outputs = task.forward({"embed": embed})
    jax.block_until_ready(outputs["task_logits"])

    # sanity: kernel matches a bf16-input / f32-accumulate JAX reference
    x_bf = embed.reshape(-1, hidden).astype(jnp.bfloat16)
    w_bf = task.w_bf16
    ref = jnp.dot(x_bf, w_bf, preferred_element_type=jnp.float32) + task.b_f32
    got = outputs["task_logits"].reshape(-1, num_classes)
    assert jnp.allclose(got, ref, atol=1e-3, rtol=1e-3), (
        float(jnp.max(jnp.abs(got - ref))))

    preds = task.predict(outputs)
    losses = task.loss(outputs, {"task_labels": labels})
    jax.block_until_ready(preds["task_pred"])
    jax.block_until_ready(losses["task_loss"])

    # trivial concrete base-class methods
    assert task.cost(outputs, {}) == {}
    assert task.attn_mask(outputs) == {}
    assert task.key_mask(outputs) == {}
    assert task.query_mask(outputs) is None

    print("KERNEL_OK")
</pallas_src>

<mosaic_0001>
module attributes {stable_mosaic.version = 11 : i64} {
  func.func @_linear_head_kernel(%arg0: i32, %arg1: memref<16x32xf32, #tpu.memory_space<vmem>>, %arg2: memref<32x8xbf16, #tpu.memory_space<vmem>>, %arg3: memref<1x8xf32, #tpu.memory_space<vmem>>, %arg4: memref<16x8xf32, #tpu.memory_space<vmem>>) attributes {dimension_semantics = [#tpu.dimension_semantics<parallel>], iteration_bounds = array<i64: 1>, scalar_prefetch = 0 : i64, scratch_operands = 0 : i64, tpu.core_type = #tpu.core_type<tc>, window_params = [{transform_indices = @transform_0, window_bounds = array<i64: 16, 32>}, {pipeline_mode = #tpu.pipeline_mode<synchronous>, transform_indices = @transform_1, window_bounds = array<i64: 32, 8>}, {pipeline_mode = #tpu.pipeline_mode<synchronous>, transform_indices = @transform_2, window_bounds = array<i64: 1, 8>}, {transform_indices = @transform_3, window_bounds = array<i64: 16, 8>}]} {
    %c0 = arith.constant 0 : index
    %c0_0 = arith.constant 0 : index
    %0 = vector.load %arg1[%c0, %c0_0] : memref<16x32xf32, #tpu.memory_space<vmem>>, vector<16x32xf32>
    %1 = arith.truncf %0 : vector<16x32xf32> to vector<16x32xbf16>
    %c0_1 = arith.constant 0 : index
    %c0_2 = arith.constant 0 : index
    %2 = vector.load %arg2[%c0_1, %c0_2] : memref<32x8xbf16, #tpu.memory_space<vmem>>, vector<32x8xbf16>
    %cst = arith.constant dense<0.000000e+00> : vector<16x8xf32>
    %3 = tpu.matmul %1, %2, %cst {dimension_numbers = #tpu.dot_dimension_numbers<[1], [0], [0], [1], [0, 0, 1, 1], [], []>} : vector<16x32xbf16>, vector<32x8xbf16>, vector<16x8xf32> -> vector<16x8xf32>
    %c0_3 = arith.constant 0 : index
    %c0_4 = arith.constant 0 : index
    %4 = vector.load %arg3[%c0_3, %c0_4] : memref<1x8xf32, #tpu.memory_space<vmem>>, vector<1x8xf32>
    %5 = vector.broadcast %4 : vector<1x8xf32> to vector<16x8xf32>
    %6 = arith.addf %3, %5 : vector<16x8xf32>
    %c0_5 = arith.constant 0 : index
    %c0_6 = arith.constant 0 : index
    %7 = vector.load %arg4[%c0_5, %c0_6] : memref<16x8xf32, #tpu.memory_space<vmem>>, vector<16x8xf32>
    tpu.vector_store %arg4[%c0_5, %c0_6], %6 {strides = array<i32>} : memref<16x8xf32, #tpu.memory_space<vmem>>, vector<16x8xf32>,
    return
  }
  func.func @transform_0(%arg0: i32) -> (i32, i32) {
    %c0_i32 = arith.constant 0 : i32
    %c0_i32_0 = arith.constant 0 : i32
    return %arg0, %c0_i32 : i32, i32
  }
  func.func @transform_1(%arg0: i32) -> (i32, i32) {
    %c0_i32 = arith.constant 0 : i32
    %c0_i32_0 = arith.constant 0 : i32
    %c0_i32_1 = arith.constant 0 : i32
    return %c0_i32, %c0_i32_0 : i32, i32
  }
  func.func @transform_2(%arg0: i32) -> (i32, i32) {
    %c0_i32 = arith.constant 0 : i32
    %c0_i32_0 = arith.constant 0 : i32
    %c0_i32_1 = arith.constant 0 : i32
    return %c0_i32, %c0_i32_0 : i32, i32
  }
  func.func @transform_3(%arg0: i32) -> (i32, i32) {
    %c0_i32 = arith.constant 0 : i32
    %c0_i32_0 = arith.constant 0 : i32
    return %arg0, %c0_i32 : i32, i32
  }
}

</mosaic_0001>

<llo_original>
// kernel: tpu_custom_call.1
$region0: #{tpu_custom_call.1}
  #allocation0 [shape = 'u32[]', space=smem, size = 0x4, offset = 0x4, fixed_abs, tag = 'smem constant byte address 0x4 - core index']
  #allocation1 [shape = 'u32[144,128]{1,0:T(1,128)}', space=vmem, size = 0x12000, scoped, tag = 'internal scratch']
  %s0 = inlined_call_operand.vmem [shape: f32[16,32], index: 0, kind: input, shape index: {}]
  %s1 = inlined_call_operand.vmem [shape: bf16[32,8], index: 1, kind: input, shape index: {}]
  %s2 = inlined_call_operand.vmem [shape: f32[1,8], index: 2, kind: input, shape index: {}]
  %s3 = inlined_call_operand.vmem [shape: f32[16,8], index: 3, kind: output, shape index: {}]
  %s4 = sld [smem:[#allocation0]]
  $region22: #{tpu_custom_call.1} parent=0
    _
  %s6 = ssub.s32 1, %s4
  %s7 = scalar_select 0, %s6, %s4
  // Predicated region
  $region2: #{tpu_custom_call.1} parent=0 // pred_check
    _
  $region3: #{tpu_custom_call.1} parent=0 // pred_check_branch
    %9 = sbr.rel (0) target = $region5
  $region4: #{tpu_custom_call.1} parent=0 // pred_region
    _
  $region5: #{tpu_custom_call.1} parent=0 // pred_fallthru
    _
  // Predicated region
  $region6: #{tpu_custom_call.1} parent=0 // pred_check
    _
  $region7: #{tpu_custom_call.1} parent=0 // pred_check_branch
    %11 = sbr.rel (0) target = $region9
  $region8: #{tpu_custom_call.1} parent=0 // pred_region
    _
  $region9: #{tpu_custom_call.1} parent=0 // pred_fallthru
    _
  // Predicated region
  $region10: #{tpu_custom_call.1} parent=0 // pred_check
    _
  $region11: #{tpu_custom_call.1} parent=0 // pred_check_branch
    %13 = sbr.rel (0) target = $region13
  $region12: #{tpu_custom_call.1} parent=0 // pred_region
    _
  $region13: #{tpu_custom_call.1} parent=0 // pred_fallthru
    _
  %v15 = vld [vmem:[%s0] sm:$0xff]
  %v16 = vld [vmem:[%s0 + $0x8] sm:$0xff]
  %v17 = vpack.c.bf16 %v16, %v15
  %v18 = vld [vmem:[%s1] sm:$0xf]
  %v19 = vld [vmem:[%s1 + $0x4] sm:$0xf]
  %v20 = vld [vmem:[%s1 + $0x8] sm:$0xf]
  %v21 = vld [vmem:[%s1 + $0xc] sm:$0xf]
  %v22 = vld [vmem:[%s2] sm:$0x1]
  %v24 = vlaneseq
  %v25 = vshrl.u32 %v24, 7
  %v26 = vsub.s32 0, %v25
  %v27 = vrot.slane %v22, %v26
  %v33 = vunpack.c.l.b16 %v18
  %v34 = vunpack.c.l.b16 %v19
  %v35 = vunpack.c.l.b16 %v20
  %v36 = vunpack.c.l.b16 %v21
  %v37 = vpack.c.b16 %v34, %v33
  %v38 = vpack.c.b16 %v36, %v35
  %vm41 = vcmask 261120
  %v43 = vsel %vm41, %v17, 0
  %45 = vmatprep.subr.bf16.mxu0 0
  %46 = vmatpush1.bf16.msra.mxu0 %v37
  %47 = vmatprep.subr.bf16.mxu0 0
  %48 = vmatpush1.bf16.msra.mxu0 %v38
  %49 = vmatprep.subr.bf16.mxu0 0
  %50 = vmatpush1.bf16.msra.mxu0 0
  %51 = vmatprep.subr.bf16.mxu0 0
  %52 = vmatpush1.bf16.msra.mxu0 0
  %53 = vmatprep.subr.bf16.mxu0 0
  %54 = vmatpush1.bf16.msra.mxu0 0
  %55 = vmatprep.subr.bf16.mxu0 0
  %56 = vmatpush1.bf16.msra.mxu0 0
  %57 = vmatprep.subr.bf16.mxu0 0
  %58 = vmatpush1.bf16.msra.mxu0 0
  %59 = vmatprep.subr.bf16.mxu0 0
  %60 = vmatpush1.bf16.msra.mxu0 0
  %61 = vmatprep.subr.bf16.mxu0 0
  %62 = vmatpush1.bf16.msra.mxu0 0
  %63 = vmatprep.subr.bf16.mxu0 0
  %64 = vmatpush1.bf16.msra.mxu0 0
  %65 = vmatprep.subr.bf16.mxu0 0
  %66 = vmatpush1.bf16.msra.mxu0 0
  %67 = vmatprep.subr.bf16.mxu0 0
  %68 = vmatpush1.bf16.msra.mxu0 0
  %69 = vmatprep.subr.bf16.mxu0 0
  %70 = vmatpush1.bf16.msra.mxu0 0
  %71 = vmatprep.subr.bf16.mxu0 0
  %72 = vmatpush1.bf16.msra.mxu0 0
  %73 = vmatprep.subr.bf16.mxu0 0
  %74 = vmatpush1.bf16.msra.mxu0 0
  %75 = vmatprep.subr.bf16.mxu0 0
  %76 = vmatpush1.bf16.msra.mxu0 0
  %77 = vmatprep.mubr.bf16.mxu0 0
  %78 = vmatmul.mubr.bf16.gmra.mrb[0].mxu0 %v43
  %v79 = vpop.f32.mrb[0].mxu0
  %v80 = vadd.f32 %v27, %v79
  %v81 = vpop.f32.mrb[0].mxu0
  %v82 = vpop.f32.mrb[0].mxu0
  %v83 = vadd.f32 %v27, %v82
  %v84 = vpop.f32.mrb[0].mxu0
  %85 = vdwg.mxu0
  %vm86 = vcmask 64512
  %87 = vst.msk [vmem:[%s3] sm:$0xff] %vm86, %v80
  %88 = vst.msk [vmem:[%s3 + $0x8] sm:$0xff] %vm86, %v83
  // Predicated region
  $region14: #{tpu_custom_call.1} parent=0 // pred_check
    _
  $region15: #{tpu_custom_call.1} parent=0 // pred_check_branch
    %90 = sbr.rel (0) target = $region17
  $region16: #{tpu_custom_call.1} parent=0 // pred_region
    _
  $region17: #{tpu_custom_call.1} parent=0 // pred_fallthru
    _
  // Predicated region
  $region18: #{tpu_custom_call.1} parent=0 // pred_check
    _
  $region19: #{tpu_custom_call.1} parent=0 // pred_check_branch
    %92 = sbr.rel (0) target = $region21
  $region20: #{tpu_custom_call.1} parent=0 // pred_region
    _
  $region21: #{tpu_custom_call.1} parent=0 // pred_fallthru
    _

</llo_original>
